<compile_context>
chip_gen: v7x
topology: tpu7x:2x2x1
jax: 0.10.0
libtpu: 0.0.40
codegen_flags: <defaults>
</compile_context>

<pallas_src>
import jax
import jax.numpy as jnp
from jax.experimental import pallas as pl
from jax.experimental.pallas import tpu as pltpu


DEFAULT_TILE_B = 1024  # 1024x64 f32 tile = 256 KiB; double-buffered ~0.5 MiB.


def _round_up(n, m):
    return ((n + m - 1) // m) * m


def mlp_kernel(x_ref, w1_ref, b1_ref, w2_ref, b2_ref, w3_ref, b3_ref, o_ref):
    # Layer 1: Linear(64 -> 64) + ReLU.  MXU matmul with bf16 operands,
    # f32 accumulation; bias/ReLU in f32 on the VPU.
    x_bf = x_ref[...].astype(jnp.bfloat16)
    h1 = jnp.dot(x_bf, w1_ref[...].astype(jnp.bfloat16),
                 preferred_element_type=jnp.float32)
    h1 = jnp.maximum(h1 + b1_ref[...], 0.0)

    # Layer 2: Linear(64 -> 32) + ReLU.
    h2 = jnp.dot(h1.astype(jnp.bfloat16), w2_ref[...].astype(jnp.bfloat16),
                 preferred_element_type=jnp.float32)
    h2 = jnp.maximum(h2 + b2_ref[...], 0.0)

    # Layer 3: Linear(32 -> 1).  A (TILE_B,32)@(32,1) MXU matmul would use a
    # single output column of the systolic array; instead do a VPU multiply with
    # the (1,32) weight row and an XLU lane reduction (units idle during the
    # MXU work above), plus the SMEM scalar bias.
    o = jnp.sum(h2 * w3_ref[...], axis=-1, keepdims=True) + b3_ref[0, 0]
    o_ref[...] = o


def three_layer_net(x, w1, b1, w2, b2, w3, b3, *, tile_b=None):
    """x: (B, 64) f32; w*: (in, out) f32; b1/b2: (1, out); w3: (32,1); b3: (1,1).

    Returns (B, 1) f32.
    """
    B = x.shape[0]
    if tile_b is None:
        tile_b = min(DEFAULT_TILE_B, _round_up(B, 8))  # multiple of 8 sublanes
    B_pad = _round_up(B, tile_b)
    if B_pad != B:
        x = jnp.pad(x, ((0, B_pad - B), (0, 0)))

    w3_row = w3.reshape(1, 32)   # (32,1) -> (1,32) for the VPU multiply
    b3_s = b3.reshape(1, 1)      # scalar, passed through SMEM

    grid = (B_pad // tile_b,)

    # Weights/biases: whole-array blocks with constant index_map -> stay
    # VMEM-resident across all grid steps.
    def resident(shape):
        return pl.BlockSpec(shape, lambda i: (0, 0))

    flops = 2 * B_pad * (64 * 64 + 64 * 32 + 32)
    bytes_accessed = (B_pad * 64 * 4            # x in
                      + B_pad * 4               # out
                      + 4 * (64 * 64 + 64 + 64 * 32 + 32 + 32 + 1))  # params

    out = pl.pallas_call(
        mlp_kernel,
        out_shape=jax.ShapeDtypeStruct((B_pad, 1), jnp.float32),
        grid=grid,
        in_specs=[
            pl.BlockSpec((tile_b, 64), lambda i: (i, 0)),          # x: batch-tiled
            resident((64, 64)),                                    # w1
            resident((1, 64)),                                     # b1
            resident((64, 32)),                                    # w2
            resident((1, 32)),                                     # b2
            resident((1, 32)),                                     # w3 (as a row)
            pl.BlockSpec(memory_space=pltpu.MemorySpace.SMEM),     # b3 scalar
        ],
        out_specs=pl.BlockSpec((tile_b, 1), lambda i: (i, 0)),
        compiler_params=pltpu.CompilerParams(
            dimension_semantics=("parallel",)),                    # v7x megacore
        cost_estimate=pl.CostEstimate(
            flops=flops, transcendentals=0, bytes_accessed=bytes_accessed),
    )(x, w1, b1, w2, b2, w3_row, b3_s)

    return out[:B]


def init_params(key):
    """nn.Linear-style init (uniform +/- 1/sqrt(fan_in)); weights are (in, out)."""
    ks = jax.random.split(key, 6)

    def linear(kw, kb, fan_in, fan_out):
        bound = 1.0 / jnp.sqrt(fan_in)
        w = jax.random.uniform(kw, (fan_in, fan_out), jnp.float32, -bound, bound)
        b = jax.random.uniform(kb, (1, fan_out), jnp.float32, -bound, bound)
        return w, b

    w1, b1 = linear(ks[0], ks[1], 64, 64)
    w2, b2 = linear(ks[2], ks[3], 64, 32)
    w3, b3 = linear(ks[4], ks[5], 32, 1)
    return w1, b1, w2, b2, w3, b3


def _reference_f32(x, w1, b1, w2, b2, w3, b3):
    h1 = jnp.maximum(x @ w1 + b1, 0.0)
    h2 = jnp.maximum(h1 @ w2 + b2, 0.0)
    return h2 @ w3 + b3.reshape(1, 1)


def _reference_bf16(x, w1, b1, w2, b2, w3, b3):
    # Same bf16-operand / f32-accumulate math the kernel performs.
    bf = jnp.bfloat16
    h1 = jnp.dot(x.astype(bf), w1.astype(bf), preferred_element_type=jnp.float32)
    h1 = jnp.maximum(h1 + b1, 0.0)
    h2 = jnp.dot(h1.astype(bf), w2.astype(bf), preferred_element_type=jnp.float32)
    h2 = jnp.maximum(h2 + b2, 0.0)
    return jnp.sum(h2 * w3.reshape(1, 32), axis=-1, keepdims=True) + b3.reshape(1, 1)


if __name__ == "__main__":
    key = jax.random.PRNGKey(0)
    k_x, k_p, k_x2 = jax.random.split(key, 3)

    params = init_params(k_p)

    # Small-batch check (single grid step, tile == batch).
    B = 8
    x = jax.random.normal(k_x, (B, 64), jnp.float32)
    out = jax.block_until_ready(three_layer_net(x, *params))
    assert out.shape == (B, 1)
    # Loose check vs the f32 PyTorch-equivalent math (bf16 matmul operands).
    ref = _reference_f32(x, *params)
    assert jnp.allclose(out, ref, atol=5e-2, rtol=5e-2)
    # Tight check vs the bf16-operand reference (same math as the kernel).
    ref_bf = _reference_bf16(x, *params)
    assert jnp.allclose(out, ref_bf, atol=2e-3, rtol=2e-3)

    # Larger batch: exercises the batch grid, resident weights, and padding path.
    B2 = 2500
    x2 = jax.random.normal(k_x2, (B2, 64), jnp.float32)
    out2 = jax.block_until_ready(three_layer_net(x2, *params))
    assert out2.shape == (B2, 1)
    ref2 = _reference_f32(x2, *params)
    assert jnp.allclose(out2, ref2, atol=5e-2, rtol=5e-2)

    print("KERNEL_OK")
</pallas_src>

<mosaic_0001>
module attributes {stable_mosaic.version = 11 : i64} {
  func.func @mlp_kernel(%arg0: i32, %arg1: memref<8x64xf32, #tpu.memory_space<vmem>>, %arg2: memref<64x64xf32, #tpu.memory_space<vmem>>, %arg3: memref<1x64xf32, #tpu.memory_space<vmem>>, %arg4: memref<64x32xf32, #tpu.memory_space<vmem>>, %arg5: memref<1x32xf32, #tpu.memory_space<vmem>>, %arg6: memref<1x32xf32, #tpu.memory_space<vmem>>, %arg7: memref<1x1xf32, #tpu.memory_space<smem>>, %arg8: memref<8x1xf32, #tpu.memory_space<vmem>>) attributes {dimension_semantics = [#tpu.dimension_semantics<parallel>], iteration_bounds = array<i64: 1>, scalar_prefetch = 0 : i64, scratch_operands = 0 : i64, tpu.core_type = #tpu.core_type<tc>, window_params = [{transform_indices = @transform_0, window_bounds = array<i64: 8, 64>}, {pipeline_mode = #tpu.pipeline_mode<synchronous>, transform_indices = @transform_1, window_bounds = array<i64: 64, 64>}, {pipeline_mode = #tpu.pipeline_mode<synchronous>, transform_indices = @transform_2, window_bounds = array<i64: 1, 64>}, {pipeline_mode = #tpu.pipeline_mode<synchronous>, transform_indices = @transform_3, window_bounds = array<i64: 64, 32>}, {pipeline_mode = #tpu.pipeline_mode<synchronous>, transform_indices = @transform_4, window_bounds = array<i64: 1, 32>}, {pipeline_mode = #tpu.pipeline_mode<synchronous>, transform_indices = @transform_5, window_bounds = array<i64: 1, 32>}, {transform_indices = @transform_6, window_bounds = array<i64: 1, 1>}, {transform_indices = @transform_7, window_bounds = array<i64: 8, 1>}]} {
    %c0 = arith.constant 0 : index
    %c0_0 = arith.constant 0 : index
    %0 = vector.load %arg1[%c0, %c0_0] : memref<8x64xf32, #tpu.memory_space<vmem>>, vector<8x64xf32>
    %1 = arith.truncf %0 : vector<8x64xf32> to vector<8x64xbf16>
    %c0_1 = arith.constant 0 : index
    %c0_2 = arith.constant 0 : index
    %2 = vector.load %arg2[%c0_1, %c0_2] : memref<64x64xf32, #tpu.memory_space<vmem>>, vector<64x64xf32>
    %3 = arith.truncf %2 : vector<64x64xf32> to vector<64x64xbf16>
    %cst = arith.constant dense<0.000000e+00> : vector<8x64xf32>
    %4 = tpu.matmul %1, %3, %cst {dimension_numbers = #tpu.dot_dimension_numbers<[1], [0], [0], [1], [0, 0, 1, 1], [], []>} : vector<8x64xbf16>, vector<64x64xbf16>, vector<8x64xf32> -> vector<8x64xf32>
    %c0_3 = arith.constant 0 : index
    %c0_4 = arith.constant 0 : index
    %5 = vector.load %arg3[%c0_3, %c0_4] : memref<1x64xf32, #tpu.memory_space<vmem>>, vector<1x64xf32>
    %6 = vector.broadcast %5 : vector<1x64xf32> to vector<8x64xf32>
    %7 = arith.addf %4, %6 : vector<8x64xf32>
    %cst_5 = arith.constant 0.000000e+00 : f32
    %8 = vector.broadcast %cst_5 : f32 to vector<8x64xf32>
    %9 = arith.maximumf %7, %8 : vector<8x64xf32>
    %10 = arith.truncf %9 : vector<8x64xf32> to vector<8x64xbf16>
    %c0_6 = arith.constant 0 : index
    %c0_7 = arith.constant 0 : index
    %11 = vector.load %arg4[%c0_6, %c0_7] : memref<64x32xf32, #tpu.memory_space<vmem>>, vector<64x32xf32>
    %12 = arith.truncf %11 : vector<64x32xf32> to vector<64x32xbf16>
    %cst_8 = arith.constant dense<0.000000e+00> : vector<8x32xf32>
    %13 = tpu.matmul %10, %12, %cst_8 {dimension_numbers = #tpu.dot_dimension_numbers<[1], [0], [0], [1], [0, 0, 1, 1], [], []>} : vector<8x64xbf16>, vector<64x32xbf16>, vector<8x32xf32> -> vector<8x32xf32>
    %c0_9 = arith.constant 0 : index
    %c0_10 = arith.constant 0 : index
    %14 = vector.load %arg5[%c0_9, %c0_10] : memref<1x32xf32, #tpu.memory_space<vmem>>, vector<1x32xf32>
    %15 = vector.broadcast %14 : vector<1x32xf32> to vector<8x32xf32>
    %16 = arith.addf %13, %15 : vector<8x32xf32>
    %cst_11 = arith.constant 0.000000e+00 : f32
    %17 = vector.broadcast %cst_11 : f32 to vector<8x32xf32>
    %18 = arith.maximumf %16, %17 : vector<8x32xf32>
    %c0_12 = arith.constant 0 : index
    %c0_13 = arith.constant 0 : index
    %19 = vector.load %arg6[%c0_12, %c0_13] : memref<1x32xf32, #tpu.memory_space<vmem>>, vector<1x32xf32>
    %20 = vector.broadcast %19 : vector<1x32xf32> to vector<8x32xf32>
    %21 = arith.mulf %18, %20 : vector<8x32xf32>
    %cst_14 = arith.constant dense<0.000000e+00> : vector<8xf32>
    %22 = vector.multi_reduction <add>, %21, %cst_14 [1] : vector<8x32xf32> to vector<8xf32>
    %23 = vector.shape_cast %22 : vector<8xf32> to vector<8x1xf32>
    %c0_15 = arith.constant 0 : index
    %c0_16 = arith.constant 0 : index
    %24 = memref.load %arg7[%c0_15, %c0_16] : memref<1x1xf32, #tpu.memory_space<smem>>
    %25 = vector.broadcast %24 : f32 to vector<8x1xf32>
    %26 = arith.addf %23, %25 : vector<8x1xf32>
    %c0_17 = arith.constant 0 : index
    %c0_18 = arith.constant 0 : index
    %27 = vector.load %arg8[%c0_17, %c0_18] : memref<8x1xf32, #tpu.memory_space<vmem>>, vector<8x1xf32>
    tpu.vector_store %arg8[%c0_17, %c0_18], %26 {strides = array<i32>} : memref<8x1xf32, #tpu.memory_space<vmem>>, vector<8x1xf32>,
    return
  }
  func.func @transform_0(%arg0: i32) -> (i32, i32) {
    %c0_i32 = arith.constant 0 : i32
    %c0_i32_0 = arith.constant 0 : i32
    return %arg0, %c0_i32 : i32, i32
  }
  func.func @transform_1(%arg0: i32) -> (i32, i32) {
    %c0_i32 = arith.constant 0 : i32
    %c0_i32_0 = arith.constant 0 : i32
    %c0_i32_1 = arith.constant 0 : i32
    return %c0_i32, %c0_i32_0 : i32, i32
  }
  func.func @transform_2(%arg0: i32) -> (i32, i32) {
    %c0_i32 = arith.constant 0 : i32
    %c0_i32_0 = arith.constant 0 : i32
    %c0_i32_1 = arith.constant 0 : i32
    return %c0_i32, %c0_i32_0 : i32, i32
  }
  func.func @transform_3(%arg0: i32) -> (i32, i32) {
    %c0_i32 = arith.constant 0 : i32
    %c0_i32_0 = arith.constant 0 : i32
    %c0_i32_1 = arith.constant 0 : i32
    return %c0_i32, %c0_i32_0 : i32, i32
  }
  func.func @transform_4(%arg0: i32) -> (i32, i32) {
    %c0_i32 = arith.constant 0 : i32
    %c0_i32_0 = arith.constant 0 : i32
    %c0_i32_1 = arith.constant 0 : i32
    return %c0_i32, %c0_i32_0 : i32, i32
  }
  func.func @transform_5(%arg0: i32) -> (i32, i32) {
    %c0_i32 = arith.constant 0 : i32
    %c0_i32_0 = arith.constant 0 : i32
    %c0_i32_1 = arith.constant 0 : i32
    return %c0_i32, %c0_i32_0 : i32, i32
  }
  func.func @transform_6(%arg0: i32) -> (i32, i32) {
    %c0_i32 = arith.constant 0 : i32
    %c0_i32_0 = arith.constant 0 : i32
    %c0_i32_1 = arith.constant 0 : i32
    return %c0_i32, %c0_i32_0 : i32, i32
  }
  func.func @transform_7(%arg0: i32) -> (i32, i32) {
    %c0_i32 = arith.constant 0 : i32
    %c0_i32_0 = arith.constant 0 : i32
    return %arg0, %c0_i32 : i32, i32
  }
}

</mosaic_0001>

<llo_original>
// kernel: tpu_custom_call.1
$region0: #{tpu_custom_call.1}
  #allocation0 [shape = 'u32[]', space=smem, size = 0x4, offset = 0x4, fixed_abs, tag = 'smem constant byte address 0x4 - core index']
  #allocation1 [shape = 'u32[144,128]{1,0:T(1,128)}', space=vmem, size = 0x12000, scoped, tag = 'internal scratch']
  #allocation2 [shape = 'f32[1,1]{1,0:T(1,128)S(6)}', space=smem, size = 0x200, scoped, tag = 'scoped memory for tpu_custom_call.1']
  %s0 = inlined_call_operand.vmem [shape: f32[8,64], index: 0, kind: input, shape index: {}]
  %s1 = inlined_call_operand.vmem [shape: f32[64,64], index: 1, kind: input, shape index: {}]
  %s2 = inlined_call_operand.vmem [shape: f32[1,64], index: 2, kind: input, shape index: {}]
  %s3 = inlined_call_operand.vmem [shape: f32[64,32], index: 3, kind: input, shape index: {}]
  %s4 = inlined_call_operand.vmem [shape: f32[1,32], index: 4, kind: input, shape index: {}]
  %s5 = inlined_call_operand.vmem [shape: f32[1,32], index: 5, kind: input, shape index: {}]
  %s6 = inlined_call_operand.<no memory space> [shape: f32[1,1], index: 6, kind: input, shape index: {}]
  %s7 = inlined_call_operand.vmem [shape: f32[8,1], index: 7, kind: output, shape index: {}]
  %s8 = sld [smem:[#allocation0]]
  $region38: #{tpu_custom_call.1} parent=0
    _
  %s10 = ssub.s32 1, %s8
  %s11 = scalar_select 0, %s10, %s8
  %12 = sst [smem:[#allocation2]] %s6
  // Predicated region
  $region2: #{tpu_custom_call.1} parent=0 // pred_check
    _
  $region3: #{tpu_custom_call.1} parent=0 // pred_check_branch
    %14 = sbr.rel (0) target = $region5
  $region4: #{tpu_custom_call.1} parent=0 // pred_region
    _
  $region5: #{tpu_custom_call.1} parent=0 // pred_fallthru
    _
  // Predicated region
  $region6: #{tpu_custom_call.1} parent=0 // pred_check
    _
  $region7: #{tpu_custom_call.1} parent=0 // pred_check_branch
    %16 = sbr.rel (0) target = $region9
  $region8: #{tpu_custom_call.1} parent=0 // pred_region
    _
  $region9: #{tpu_custom_call.1} parent=0 // pred_fallthru
    _
  // Predicated region
  $region10: #{tpu_custom_call.1} parent=0 // pred_check
    _
  $region11: #{tpu_custom_call.1} parent=0 // pred_check_branch
    %18 = sbr.rel (0) target = $region13
  $region12: #{tpu_custom_call.1} parent=0 // pred_region
    _
  $region13: #{tpu_custom_call.1} parent=0 // pred_fallthru
    _
  // Predicated region
  $region14: #{tpu_custom_call.1} parent=0 // pred_check
    _
  $region15: #{tpu_custom_call.1} parent=0 // pred_check_branch
    %20 = sbr.rel (0) target = $region17
  $region16: #{tpu_custom_call.1} parent=0 // pred_region
    _
  $region17: #{tpu_custom_call.1} parent=0 // pred_fallthru
    _
  // Predicated region
  $region18: #{tpu_custom_call.1} parent=0 // pred_check
    _
  $region19: #{tpu_custom_call.1} parent=0 // pred_check_branch
    %22 = sbr.rel (0) target = $region21
  $region20: #{tpu_custom_call.1} parent=0 // pred_region
    _
  $region21: #{tpu_custom_call.1} parent=0 // pred_fallthru
    _
  // Predicated region
  $region22: #{tpu_custom_call.1} parent=0 // pred_check
    _
  $region23: #{tpu_custom_call.1} parent=0 // pred_check_branch
    %24 = sbr.rel (0) target = $region25
  $region24: #{tpu_custom_call.1} parent=0 // pred_region
    _
  $region25: #{tpu_custom_call.1} parent=0 // pred_fallthru
    _
  // Predicated region
  $region26: #{tpu_custom_call.1} parent=0 // pred_check
    _
  $region27: #{tpu_custom_call.1} parent=0 // pred_check_branch
    %26 = sbr.rel (0) target = $region29
  $region28: #{tpu_custom_call.1} parent=0 // pred_region
    _
  $region29: #{tpu_custom_call.1} parent=0 // pred_fallthru
    _
  %v28 = vld [vmem:[%s0] sm:$0xff]
  %v29 = vpack.c.bf16 %v28, %v28
  %v30 = vld [vmem:[%s1] sm:$0xff]
  %v31 = vld [vmem:[%s1 + $0x8] sm:$0xff]
  %v32 = vld [vmem:[%s1 + $0x10] sm:$0xff]
  %v33 = vld [vmem:[%s1 + $0x18] sm:$0xff]
  %v34 = vld [vmem:[%s1 + $0x20] sm:$0xff]
  %v35 = vld [vmem:[%s1 + $0x28] sm:$0xff]
  %v36 = vld [vmem:[%s1 + $0x30] sm:$0xff]
  %v37 = vld [vmem:[%s1 + $0x38] sm:$0xff]
  %v38 = vpack.c.bf16 %v31, %v30
  %v39 = vpack.c.bf16 %v33, %v32
  %v40 = vpack.c.bf16 %v35, %v34
  %v41 = vpack.c.bf16 %v37, %v36
  %v42 = vld [vmem:[%s2] sm:$0x1]
  %v44 = vlaneseq
  %v45 = vshrl.u32 %v44, 7
  %v46 = vsub.s32 0, %v45
  %v47 = vrot.slane %v42, %v46
  %vm49 = vcmask 523264
  %v51 = vsel %vm49, %v29, 0
  %53 = vmatprep.subr.bf16.mxu0 0
  %54 = vmatpush1.bf16.msra.mxu0 %v38
  %55 = vmatprep.subr.bf16.mxu0 0
  %56 = vmatpush1.bf16.msra.mxu0 %v39
  %57 = vmatprep.subr.bf16.mxu0 0
  %58 = vmatpush1.bf16.msra.mxu0 %v40
  %59 = vmatprep.subr.bf16.mxu0 0
  %60 = vmatpush1.bf16.msra.mxu0 %v41
  %61 = vmatprep.subr.bf16.mxu0 0
  %62 = vmatpush1.bf16.msra.mxu0 0
  %63 = vmatprep.subr.bf16.mxu0 0
  %64 = vmatpush1.bf16.msra.mxu0 0
  %65 = vmatprep.subr.bf16.mxu0 0
  %66 = vmatpush1.bf16.msra.mxu0 0
  %67 = vmatprep.subr.bf16.mxu0 0
  %68 = vmatpush1.bf16.msra.mxu0 0
  %69 = vmatprep.subr.bf16.mxu0 0
  %70 = vmatpush1.bf16.msra.mxu0 0
  %71 = vmatprep.subr.bf16.mxu0 0
  %72 = vmatpush1.bf16.msra.mxu0 0
  %73 = vmatprep.subr.bf16.mxu0 0
  %74 = vmatpush1.bf16.msra.mxu0 0
  %75 = vmatprep.subr.bf16.mxu0 0
  %76 = vmatpush1.bf16.msra.mxu0 0
  %77 = vmatprep.subr.bf16.mxu0 0
  %78 = vmatpush1.bf16.msra.mxu0 0
  %79 = vmatprep.subr.bf16.mxu0 0
  %80 = vmatpush1.bf16.msra.mxu0 0
  %81 = vmatprep.subr.bf16.mxu0 0
  %82 = vmatpush1.bf16.msra.mxu0 0
  %83 = vmatprep.subr.bf16.mxu0 0
  %84 = vmatpush1.bf16.msra.mxu0 0
  %85 = vmatprep.mubr.bf16.mxu0 0
  %86 = vmatmul.mubr.bf16.gmra.mrb[0].mxu0 %v51
  %v87 = vpop.f32.mrb[0].mxu0
  %v88 = vadd.f32 %v47, %v87
  %v89 = vpop.f32.mrb[0].mxu0
  %v90 = vpop.f32.mrb[0].mxu0
  %v91 = vpop.f32.mrb[0].mxu0
  %92 = vdwg.mxu0
  %v93 = vmax.f32 %v88, 0.0
  %v94 = vpack.c.bf16 %v93, %v93
  %v95 = vld [vmem:[%s3] sm:$0xff]
  %v96 = vld [vmem:[%s3 + $0x8] sm:$0xff]
  %v97 = vld [vmem:[%s3 + $0x10] sm:$0xff]
  %v98 = vld [vmem:[%s3 + $0x18] sm:$0xff]
  %v99 = vld [vmem:[%s3 + $0x20] sm:$0xff]
  %v100 = vld [vmem:[%s3 + $0x28] sm:$0xff]
  %v101 = vld [vmem:[%s3 + $0x30] sm:$0xff]
  %v102 = vld [vmem:[%s3 + $0x38] sm:$0xff]
  %v103 = vpack.c.bf16 %v96, %v95
  %v104 = vpack.c.bf16 %v98, %v97
  %v105 = vpack.c.bf16 %v100, %v99
  %v106 = vpack.c.bf16 %v102, %v101
  %v107 = vld [vmem:[%s4] sm:$0x1]
  %v109 = vlaneseq
  %v110 = vshrl.u32 %v109, 7
  %v111 = vsub.s32 0, %v110
  %v112 = vrot.slane %v107, %v111
  %v115 = vsel %vm49, %v94, 0
  %117 = vmatprep.subr.bf16.mxu0 0
  %118 = vmatpush1.bf16.msra.mxu0 %v103
  %119 = vmatprep.subr.bf16.mxu0 0
  %120 = vmatpush1.bf16.msra.mxu0 %v104
  %121 = vmatprep.subr.bf16.mxu0 0
  %122 = vmatpush1.bf16.msra.mxu0 %v105
  %123 = vmatprep.subr.bf16.mxu0 0
  %124 = vmatpush1.bf16.msra.mxu0 %v106
  %125 = vmatprep.subr.bf16.mxu0 0
  %126 = vmatpush1.bf16.msra.mxu0 0
  %127 = vmatprep.subr.bf16.mxu0 0
  %128 = vmatpush1.bf16.msra.mxu0 0
  %129 = vmatprep.subr.bf16.mxu0 0
  %130 = vmatpush1.bf16.msra.mxu0 0
  %131 = vmatprep.subr.bf16.mxu0 0
  %132 = vmatpush1.bf16.msra.mxu0 0
  %133 = vmatprep.subr.bf16.mxu0 0
  %134 = vmatpush1.bf16.msra.mxu0 0
  %135 = vmatprep.subr.bf16.mxu0 0
  %136 = vmatpush1.bf16.msra.mxu0 0
  %137 = vmatprep.subr.bf16.mxu0 0
  %138 = vmatpush1.bf16.msra.mxu0 0
  %139 = vmatprep.subr.bf16.mxu0 0
  %140 = vmatpush1.bf16.msra.mxu0 0
  %141 = vmatprep.subr.bf16.mxu0 0
  %142 = vmatpush1.bf16.msra.mxu0 0
  %143 = vmatprep.subr.bf16.mxu0 0
  %144 = vmatpush1.bf16.msra.mxu0 0
  %145 = vmatprep.subr.bf16.mxu0 0
  %146 = vmatpush1.bf16.msra.mxu0 0
  %147 = vmatprep.subr.bf16.mxu0 0
  %148 = vmatpush1.bf16.msra.mxu0 0
  %149 = vmatprep.mubr.bf16.mxu0 0
  %150 = vmatmul.mubr.bf16.gmra.mrb[0].mxu0 %v115
  %v151 = vpop.f32.mrb[0].mxu0
  %v152 = vadd.f32 %v112, %v151
  %v153 = vpop.f32.mrb[0].mxu0
  %v154 = vpop.f32.mrb[0].mxu0
  %v155 = vpop.f32.mrb[0].mxu0
  %156 = vdwg.mxu0
  %v157 = vmax.f32 %v152, 0.0
  %v158 = vld [vmem:[%s5] sm:$0x1]
  %v160 = vlaneseq
  %v161 = vshrl.u32 %v160, 7
  %v162 = vsub.s32 0, %v161
  %v163 = vrot.slane %v158, %v162
  %v165 = vmul.f32 %v157, %v163
  %vm166 = vcmask 261120
  %v167 = vsel %vm166, %v165, 0.0
  %168 = vadd.xlane.f32.xlu0 %v167
  %v169 = vpop.xlane.xlu0 %168
  %s170 = sld [smem:[#allocation2]]
  %v171 = vstv %s170
  %v172 = vadd.f32 %v169, %v171
  %vm173 = vcmask 7168
  %174 = vst.msk [vmem:[%s7] sm:$0xff] %vm173, %v172
  // Predicated region
  $region30: #{tpu_custom_call.1} parent=0 // pred_check
    _
  $region31: #{tpu_custom_call.1} parent=0 // pred_check_branch
    %176 = sbr.rel (0) target = $region33
  $region32: #{tpu_custom_call.1} parent=0 // pred_region
    _
  $region33: #{tpu_custom_call.1} parent=0 // pred_fallthru
    _
  // Predicated region
  $region34: #{tpu_custom_call.1} parent=0 // pred_check
    _
  $region35: #{tpu_custom_call.1} parent=0 // pred_check_branch
    %178 = sbr.rel (0) target = $region37
  $region36: #{tpu_custom_call.1} parent=0 // pred_region
    _
  $region37: #{tpu_custom_call.1} parent=0 // pred_fallthru
    _

</llo_original>
